<compile_context>
chip_gen: v7x
topology: tpu7x:2x2x1
jax: 0.10.0
libtpu: 0.0.40
codegen_flags: <defaults>
</compile_context>

<pallas_src>
import functools
import math

import jax
import jax.numpy as jnp
from jax import lax
from jax.experimental import pallas as pl
from jax.experimental.pallas import tpu as pltpu

_LANE = 128
_SUBLANE = 8


# ----------------------------------------------------------------------------
# Pallas kernel: one chunk of k timesteps, all features fused, mix folded in.
# ----------------------------------------------------------------------------
def lssl_chunk_kernel(u_ref, s_ref, q_ref, p_ref, kk_ref, bias_ref, o_ref, x_ref):
    """Advance the packed state k steps and emit k mixed outputs.

    u_ref   : (tb, k*F)      input chunk (f32), column index = m*F + f
    s_ref   : (FN, FN)       block-diag (A_bar_f^T)^k           (f32, state path)
    q_ref   : (k*F, FN)      causal input -> end-of-chunk state (f32, state path)
    p_ref   : (FN, k*Fo)     state_in -> mixed outputs          (bf16/f32, output path)
    kk_ref  : (k*F, k*Fo)    causal input -> mixed outputs      (bf16/f32, output path)
    bias_ref: (1, k*Fo)      mix bias tiled over the k timesteps (f32)
    o_ref   : (tb, k*Fo)     mixed outputs, column index = j*Fo + o
    x_ref   : (tb, FN)       VMEM scratch: packed f32 state carried across chunks
    """
    ci = pl.program_id(1)

    @pl.when(ci == 0)
    def _init_state():
        x_ref[...] = jnp.zeros_like(x_ref)

    x = x_ref[...]          # state BEFORE this chunk  (tb, FN), f32
    u = u_ref[...]          # (tb, k*F), f32

    # ---- output path (may run in bf16 on the MXU; accumulate in f32) --------
    out_dt = kk_ref.dtype
    acc = jnp.dot(u.astype(out_dt), kk_ref[...], preferred_element_type=jnp.float32)
    acc = acc + jnp.dot(x.astype(out_dt), p_ref[...], preferred_element_type=jnp.float32)
    o_ref[...] = (acc + bias_ref[...]).astype(o_ref.dtype)

    # ---- state path (stays f32 for long-sequence accuracy) ------------------
    x_ref[...] = (
        jnp.dot(x, s_ref[...], preferred_element_type=jnp.float32)
        + jnp.dot(u, q_ref[...], preferred_element_type=jnp.float32)
    )


# ----------------------------------------------------------------------------
# Chunk-operator precompute (pure JAX, tiny & static; runs once per shape).
# ----------------------------------------------------------------------------
def build_chunk_operators(params, *, k, out_path_dtype=jnp.float32):
    A_bar = params["A_bar"]          # (F, N, N)
    B_bar = params["B_bar"]          # (F, N)
    C     = params["C"]              # (F, Cch, N)
    D     = params["D"]              # (F, Cch)
    W     = params["W"]              # (Fo, Cch*F) ; input index = c*F + f
    bmix  = params["b"]              # (Fo,)

    F, N = A_bar.shape[0], A_bar.shape[-1]
    Cch = C.shape[1]
    Fo = W.shape[0]
    FN = F * N

    At = jnp.swapaxes(A_bar, -1, -2)                    # (F, N, N) = A_bar^T
    Ct = jnp.swapaxes(C, -1, -2)                        # (F, N, Cch) = C^T
    W3 = W.reshape(Fo, Cch, F)                          # W3[o, c, f] = W[o, c*F+f]

    # Powers of A_bar^T: At_pows[p, f] = (A_bar_f^T)^p, p = 0..k (f32 precompute)
    eyeN = jnp.broadcast_to(jnp.eye(N, dtype=jnp.float32), (F, N, N))

    def _pow_step(carry, _):
        nxt = jnp.einsum("fij,fjk->fik", carry, At)
        return nxt, nxt

    _, pows = lax.scan(_pow_step, eyeN, None, length=k)
    At_pows = jnp.concatenate([eyeN[None], pows], axis=0)      # (k+1, F, N, N)

    # Fold C^T and the mix weight into the output path.
    CW = jnp.einsum("fnc,ocf->fno", Ct, W3)             # (F, N, Fo) = C_f^T @ Wf^T
    DW = jnp.einsum("fc,ocf->fo", D, W3)                # (F, Fo)    = D_f  @ Wf^T

    # b_f @ (A_f^T)^p
    bApow = jnp.einsum("fi,pfin->pfn", B_bar, At_pows)  # (k+1, F, N)
    bACW = jnp.einsum("pfn,fno->pfo", bApow, CW)        # (k+1, F, Fo)

    eyeF = jnp.eye(F, dtype=jnp.float32)

    # 1) state -> state over k steps (block diagonal (A_f^T)^k)
    S_big = jnp.einsum("fg,fij->figj", eyeF, At_pows[k]).reshape(FN, FN)

    # 2) input -> end-of-chunk state: row m*F+f uses b_f (A_f^T)^{k-1-m}
    q_rows = jnp.flip(bApow[:k], axis=0)                # (k, F, N)
    Q_all = jnp.einsum("fg,mfn->mfgn", eyeF, q_rows).reshape(k * F, FN)

    # 3) state_in -> mixed outputs: column block j uses (A_f^T)^{j+1} C_f^T Wf^T
    ApCW = jnp.einsum("jfni,fio->jfno", At_pows[1:k + 1], CW)   # (k, F, N, Fo)
    P_all = jnp.transpose(ApCW, (1, 2, 0, 3)).reshape(FN, k * Fo)

    # 4) input -> mixed outputs (causal kernel, D folded on the diagonal)
    m_idx = jnp.arange(k)[:, None]
    j_idx = jnp.arange(k)[None, :]
    diff = j_idx - m_idx
    valid = diff >= 0
    Kcore = bACW[jnp.where(valid, diff, 0)]             # (k, k, F, Fo)
    Kcore = jnp.where(valid[:, :, None, None], Kcore, 0.0)
    Kcore = Kcore + jnp.where((m_idx == j_idx)[:, :, None, None],
                              DW[None, None, :, :], 0.0)
    K_all = jnp.transpose(Kcore, (0, 2, 1, 3)).reshape(k * F, k * Fo)

    # 5) mix bias tiled over the k timesteps of a chunk
    bias_row = jnp.tile(bmix, (k,))[None, :].astype(jnp.float32)

    # Output-path operators may be down-cast (bf16 MXU); state path stays f32.
    P_all = P_all.astype(out_path_dtype)
    K_all = K_all.astype(out_path_dtype)
    return S_big, Q_all, P_all, K_all, bias_row


# ----------------------------------------------------------------------------
# Hardware budgets & tile selection
# ----------------------------------------------------------------------------
def _hw_info():
    """(physical VMEM bytes per core, tensorcores to keep busy), safe fallbacks."""
    vmem_phys = 64 << 20          # conservative default (v7x per-TC VMEM)
    cores = 1
    try:
        info = pltpu.get_tpu_info()
        vmem_phys = int(info.vmem_capacity_bytes)
        cores = int(getattr(info, "num_cores", 1) or 1)
    except Exception:
        pass
    if vmem_phys <= (64 << 20):
        # 64 MiB VMEM per core => v7x-like part: 2 TCs/chip, keep both busy.
        cores = max(cores, 2)
    return vmem_phys, cores


def _vmem_bytes(tb, k, F, Fo, FN, op_bytes):
    """Conservative per-step VMEM footprint.  Operators are counted as if
    double-buffered so the non-Buffered(1) fallback also fits."""
    kF, kFo = k * F, k * Fo
    return (2 * tb * kF * 4                          # u blocks (double-buffered, f32)
            + 2 * tb * kFo * 4                       # out blocks (double-buffered, f32)
            + 2 * (FN * FN + kF * FN) * 4            # S_big, Q_all (f32 state path)
            + 2 * (FN * kFo + kF * kFo) * op_bytes   # P_all, K_all (output path)
            + 2 * kFo * 4                            # bias row
            + tb * FN * 4)                           # carried state scratch


def _batch_tile_candidates(B, max_tb=256):
    """Divisors of B that are sublane (8) multiples, largest first."""
    cands = [tb for tb in range(_SUBLANE, min(B, max_tb) + 1, _SUBLANE) if B % tb == 0]
    cands = sorted(set(cands), reverse=True)
    if not cands:
        cands = [B]           # tiny batch: full-extent block (sublane rule waived)
    return cands


def _choose_tiles(B, L, F, Fo, N, vmem_budget, cores, op_bytes):
    """Pick (batch tile tb, chunk length k): lane-dense, VMEM-checked, cost-aware."""
    FN = F * N

    def fits(tb_, k_):
        return _vmem_bytes(tb_, k_, F, Fo, FN, op_bytes) <= vmem_budget

    tbs = _batch_tile_candidates(B)
    # On 2-TC parts, prefer the largest tb that still yields >= `cores` batch
    # tiles so the "parallel" batch axis spans both TensorCores.
    want_splits = cores if B >= 2 * _SUBLANE else 1
    split_ok = [tb_ for tb_ in tbs if B // tb_ >= want_splits]
    tb = (split_ok or tbs)[0]

    # Whole sequence as one chunk when it is small (operators stay tiny).
    if L * max(F, Fo) <= 1024 and fits(tb, L):
        return tb, L

    # Lane-dense chunk length: k*F and k*Fo multiples of 128 (unmasked DMAs).
    k_lane = math.lcm(_LANE // math.gcd(F, _LANE), _LANE // math.gcd(Fo, _LANE))

    # Cost-aware target: K_all FLOPs per output element grow linearly with k
    # while per-chunk fixed overhead (~0.35us/grid step) shrinks as 1/k, so
    # T(k) ~ a*k + b/k with a ~ 2*tb*F*Fo/peak -> k* = sqrt(b/a).
    peak_flops = 2.0e14 if op_bytes == 2 else 5.0e13     # bf16 vs f32 MXU (effective)
    k_target = int(math.sqrt(0.35e-6 * peak_flops / (2.0 * F * Fo * max(tb, _SUBLANE))))
    k = max(k_lane, (max(k_target, k_lane) // k_lane) * k_lane)
    k = min(k, max(k_lane, (256 // k_lane) * k_lane))               # O(k^2) guard
    k = min(k, ((L + k_lane - 1) // k_lane) * k_lane)               # no over-long chunk

    # Shrink (k first, then tb, then lane-density as a last resort) until the
    # conservative footprint fits the VMEM budget -- never compile-OOM.
    ti = tbs.index(tb)
    while not fits(tb, k):
        if k > k_lane:
            k -= k_lane
        elif ti + 1 < len(tbs):
            ti += 1
            tb = tbs[ti]
        elif k > 1:
            k = max(1, k // 2)
        else:
            break
    return tb, k


# ----------------------------------------------------------------------------
# Parameter setup (deterministic, mirrors the PyTorch __init__ shapes)
# ----------------------------------------------------------------------------
def hippo(state_dim):
    ar = jnp.arange(state_dim, dtype=jnp.float32)
    P = jnp.sqrt(1.0 + 2.0 * ar)
    A = jnp.tril(P[:, None] * P[None, :]) - jnp.diag(ar)
    B = jnp.sqrt(2.0 * ar + 1.0)[:, None]
    return -A, B


def init_params(key, *, feature_dim, channels, state_dim, dt_min, dt_max):
    A, Bvec = hippo(state_dim)                       # (N, N), (N, 1)
    I = jnp.eye(state_dim, dtype=jnp.float32)

    keys = jax.random.split(key, 2 * feature_dim + 2)
    A_bars, B_bars, Cs, Ds = [], [], [], []
    c_std = math.sqrt(2.0 / (state_dim + channels))  # xavier_normal_
    log_lo, log_hi = math.log(dt_min), math.log(dt_max)

    for f in range(feature_dim):
        k_c, k_dt = keys[2 * f], keys[2 * f + 1]
        Cf = c_std * jax.random.normal(k_c, (channels, state_dim), dtype=jnp.float32)
        log_dt = log_lo + jax.random.uniform(k_dt, (), dtype=jnp.float32) * (log_hi - log_lo)
        dt = jnp.exp(log_dt)
        BL = jnp.linalg.inv(I - dt / 2.0 * A)
        A_bar = BL @ (I + dt / 2.0 * A)
        B_bar = (BL * dt) @ Bvec                     # (N, 1)
        A_bars.append(A_bar)
        B_bars.append(B_bar[:, 0])
        Cs.append(Cf)
        Ds.append(jnp.ones((channels,), dtype=jnp.float32))

    fan_in = feature_dim * channels
    bound = 1.0 / math.sqrt(fan_in)                  # nn.Linear default init
    W = jax.random.uniform(keys[-2], (feature_dim, fan_in),
                           minval=-bound, maxval=bound, dtype=jnp.float32)
    b = jax.random.uniform(keys[-1], (feature_dim,),
                           minval=-bound, maxval=bound, dtype=jnp.float32)

    return dict(
        A_bar=jnp.stack(A_bars),      # (F, N, N)
        B_bar=jnp.stack(B_bars),      # (F, N)
        C=jnp.stack(Cs),              # (F, channels, N)
        D=jnp.stack(Ds),              # (F, channels)
        W=W,                          # (F, F*channels)
        b=b,                          # (F,)
    )


# ----------------------------------------------------------------------------
# Forward wrapper
# ----------------------------------------------------------------------------
def stacked_lssl_forward(u, params, *, out_path_dtype=jnp.bfloat16,
                         single_buffer_constants=True):
    """u: (B, L, F) float32 -> (B, L, F) float32."""
    Bsz, L, F = u.shape
    N = params["A_bar"].shape[-1]
    Fo = params["W"].shape[0]
    FN = F * N

    op_bytes = jnp.dtype(out_path_dtype).itemsize
    vmem_phys, cores = _hw_info()
    # Raise the scoped-VMEM cap well above the 32 MiB default; leave headroom.
    vmem_limit = int(min(int(vmem_phys * 0.75), 96 << 20))
    vmem_budget = int(vmem_limit * 0.8)

    tb, k = _choose_tiles(Bsz, L, F, Fo, N, vmem_budget, cores, op_bytes)
    nb = Bsz // tb
    nc = -(-L // k)                 # ceil(L / k)
    Lp = nc * k

    S_big, Q_all, P_all, K_all, bias_row = build_chunk_operators(
        params, k=k, out_path_dtype=out_path_dtype)

    # (B, L, F) -> (B, L*F) is a free view; zero-pad tail timesteps so the last
    # chunk is full (causal: padded inputs cannot affect outputs at t < L).
    u2 = u.reshape(Bsz, L * F).astype(jnp.float32)
    if Lp != L:
        u2 = jnp.pad(u2, ((0, 0), (0, (Lp - L) * F)))

    # Loop-invariant operators: constant index_map, single-buffered (Buffered(1))
    # so they stay resident without reserving 2x their VMEM.
    const_mode = pl.Buffered(1) if single_buffer_constants else None

    def _const_spec(shape):
        if const_mode is None:
            return pl.BlockSpec(shape, lambda bi, ci: (0, 0))
        return pl.BlockSpec(shape, lambda bi, ci: (0, 0), pipeline_mode=const_mode)

    out2 = pl.pallas_call(
        lssl_chunk_kernel,
        out_shape=jax.ShapeDtypeStruct((Bsz, Lp * Fo), jnp.float32),
        grid_spec=pltpu.PrefetchScalarGridSpec(
            num_scalar_prefetch=0,
            # NOTE: chunk axis must stay last and "arbitrary" (sequential) —
            # the VMEM state scratch is carried across it and reset at ci == 0.
            grid=(nb, nc),
            in_specs=[
                pl.BlockSpec((tb, k * F), lambda bi, ci: (bi, ci)),      # u chunk
                _const_spec((FN, FN)),                                   # S_big
                _const_spec((k * F, FN)),                                # Q_all
                _const_spec((FN, k * Fo)),                               # P_all
                _const_spec((k * F, k * Fo)),                            # K_all
                _const_spec((1, k * Fo)),                                # bias row
            ],
            out_specs=pl.BlockSpec((tb, k * Fo), lambda bi, ci: (bi, ci)),
            scratch_shapes=[pltpu.VMEM((tb, FN), jnp.float32)],          # carried state
        ),
        compiler_params=pltpu.CompilerParams(
            dimension_semantics=("parallel", "arbitrary"),
            vmem_limit_bytes=vmem_limit,
        ),
    )(u2, S_big, Q_all, P_all, K_all, bias_row)

    # Column index is t*Fo + o; drop padded timesteps and view as (B, L, Fo).
    return out2[:, :L * Fo].reshape(Bsz, L, Fo)


# ----------------------------------------------------------------------------
# Pure-JAX reference (naive per-step recurrence, mirrors PyTorch exactly)
# ----------------------------------------------------------------------------
def stacked_lssl_reference(u, params):
    A_bar, B_bar, C, D = params["A_bar"], params["B_bar"], params["C"], params["D"]
    Bsz, L, F = u.shape
    At = jnp.swapaxes(A_bar, -1, -2)

    def step(x, u_t):                                   # x: (B, F, N), u_t: (B, F)
        x = jnp.einsum("bfn,fnm->bfm", x, At) + u_t[..., None] * B_bar[None]
        y = jnp.einsum("bfn,fcn->bfc", x, C) + u_t[..., None] * D[None]
        return x, y

    x0 = jnp.zeros((Bsz, F, A_bar.shape[-1]), dtype=jnp.float32)
    _, ys = lax.scan(step, x0, jnp.transpose(u, (1, 0, 2)))   # (L, B, F, Cch)
    # PyTorch cat/stack/reshape order: stacked[b, t, c*F + f] = ys[t, b, f, c]
    stacked = jnp.transpose(ys, (1, 0, 3, 2)).reshape(Bsz, L, -1)
    return stacked @ params["W"].T + params["b"]


# ----------------------------------------------------------------------------
# Demo
# ----------------------------------------------------------------------------
if __name__ == "__main__":
    batch = 2
    seq_len = 8          # config.sequence_length
    feature_dim = 4      # config.feature_dim
    channels = 2         # config.channels
    state_dim = 16       # config.state_dim
    dt_min, dt_max = 1e-3, 1e-1

    key = jax.random.PRNGKey(0)
    k_params, k_input = jax.random.split(key)

    params = init_params(
        k_params,
        feature_dim=feature_dim,
        channels=channels,
        state_dim=state_dim,
        dt_min=dt_min,
        dt_max=dt_max,
    )

    u = jax.random.normal(k_input, (batch, seq_len, feature_dim), dtype=jnp.float32)

    def _run(out_dtype, single_buf):
        fn = jax.jit(functools.partial(stacked_lssl_forward,
                                       out_path_dtype=out_dtype,
                                       single_buffer_constants=single_buf))
        return jax.block_until_ready(fn(u, params))

    try:
        out_f32 = _run(jnp.float32, True)
        out_bf16 = _run(jnp.bfloat16, True)
    except Exception:
        # Fallback if this JAX build rejects single-buffered (Buffered(1)) specs.
        out_f32 = _run(jnp.float32, False)
        out_bf16 = _run(jnp.bfloat16, False)

    ref = stacked_lssl_reference(u, params)

    assert out_f32.shape == (batch, seq_len, feature_dim), out_f32.shape
    assert out_bf16.shape == (batch, seq_len, feature_dim), out_bf16.shape
    assert bool(jnp.all(jnp.isfinite(out_f32)))
    assert bool(jnp.all(jnp.isfinite(out_bf16)))
    # f32 output path: tight check against the step-by-step reference.
    assert bool(jnp.allclose(out_f32, ref, rtol=2e-3, atol=2e-3)), \
        float(jnp.max(jnp.abs(out_f32 - ref)))
    # bf16 output path (default production mode): bf16-level tolerance.
    assert bool(jnp.allclose(out_bf16, ref, rtol=5e-2, atol=5e-2)), \
        float(jnp.max(jnp.abs(out_bf16 - ref)))
    print("KERNEL_OK")
</pallas_src>

<mosaic_0001>
module attributes {stable_mosaic.version = 11 : i64} {
  func.func @lssl_chunk_kernel(%arg0: i32, %arg1: i32, %arg2: memref<2x32xf32, #tpu.memory_space<vmem>>, %arg3: memref<64x64xf32, #tpu.memory_space<vmem>>, %arg4: memref<32x64xf32, #tpu.memory_space<vmem>>, %arg5: memref<64x32xf32, #tpu.memory_space<vmem>>, %arg6: memref<32x32xf32, #tpu.memory_space<vmem>>, %arg7: memref<1x32xf32, #tpu.memory_space<vmem>>, %arg8: memref<2x32xf32, #tpu.memory_space<vmem>>, %arg9: memref<2x64xf32, #tpu.memory_space<vmem>>) attributes {dimension_semantics = [#tpu.dimension_semantics<parallel>, #tpu.dimension_semantics<arbitrary>], iteration_bounds = array<i64: 1, 1>, scalar_prefetch = 0 : i64, scratch_operands = 1 : i64, tpu.core_type = #tpu.core_type<tc>, window_params = [{transform_indices = @transform_0, window_bounds = array<i64: 2, 32>}, {pipeline_mode = #tpu.pipeline_mode<synchronous>, transform_indices = @transform_1, window_bounds = array<i64: 64, 64>}, {pipeline_mode = #tpu.pipeline_mode<synchronous>, transform_indices = @transform_2, window_bounds = array<i64: 32, 64>}, {pipeline_mode = #tpu.pipeline_mode<synchronous>, transform_indices = @transform_3, window_bounds = array<i64: 64, 32>}, {pipeline_mode = #tpu.pipeline_mode<synchronous>, transform_indices = @transform_4, window_bounds = array<i64: 32, 32>}, {pipeline_mode = #tpu.pipeline_mode<synchronous>, transform_indices = @transform_5, window_bounds = array<i64: 1, 32>}, {transform_indices = @transform_6, window_bounds = array<i64: 2, 32>}]} {
    %c0_i32 = arith.constant 0 : i32
    %0 = arith.cmpi eq, %arg1, %c0_i32 : i32
    %1 = arith.extui %0 : i1 to i32
    %c0_i32_0 = arith.constant 0 : i32
    %2 = arith.cmpi ne, %1, %c0_i32_0 : i32
    scf.if %2 {
      %cst_21 = arith.constant 0.000000e+00 : f32
      %20 = vector.broadcast %cst_21 : f32 to vector<2x64xf32>
      %c0_22 = arith.constant 0 : index
      %c0_23 = arith.constant 0 : index
      %21 = vector.load %arg9[%c0_22, %c0_23] : memref<2x64xf32, #tpu.memory_space<vmem>>, vector<2x64xf32>
      tpu.vector_store %arg9[%c0_22, %c0_23], %20 {strides = array<i32>} : memref<2x64xf32, #tpu.memory_space<vmem>>, vector<2x64xf32>,
    } else {
    }
    %c0 = arith.constant 0 : index
    %c0_1 = arith.constant 0 : index
    %3 = vector.load %arg9[%c0, %c0_1] : memref<2x64xf32, #tpu.memory_space<vmem>>, vector<2x64xf32>
    %c0_2 = arith.constant 0 : index
    %c0_3 = arith.constant 0 : index
    %4 = vector.load %arg2[%c0_2, %c0_3] : memref<2x32xf32, #tpu.memory_space<vmem>>, vector<2x32xf32>
    %c0_4 = arith.constant 0 : index
    %c0_5 = arith.constant 0 : index
    %5 = vector.load %arg6[%c0_4, %c0_5] : memref<32x32xf32, #tpu.memory_space<vmem>>, vector<32x32xf32>
    %cst = arith.constant dense<0.000000e+00> : vector<2x32xf32>
    %6 = tpu.matmul %4, %5, %cst {dimension_numbers = #tpu.dot_dimension_numbers<[1], [0], [0], [1], [0, 0, 1, 1], [], []>} : vector<2x32xf32>, vector<32x32xf32>, vector<2x32xf32> -> vector<2x32xf32>
    %c0_6 = arith.constant 0 : index
    %c0_7 = arith.constant 0 : index
    %7 = vector.load %arg5[%c0_6, %c0_7] : memref<64x32xf32, #tpu.memory_space<vmem>>, vector<64x32xf32>
    %cst_8 = arith.constant dense<0.000000e+00> : vector<2x32xf32>
    %8 = tpu.matmul %3, %7, %cst_8 {dimension_numbers = #tpu.dot_dimension_numbers<[1], [0], [0], [1], [0, 0, 1, 1], [], []>} : vector<2x64xf32>, vector<64x32xf32>, vector<2x32xf32> -> vector<2x32xf32>
    %9 = arith.addf %6, %8 : vector<2x32xf32>
    %c0_9 = arith.constant 0 : index
    %c0_10 = arith.constant 0 : index
    %10 = vector.load %arg7[%c0_9, %c0_10] : memref<1x32xf32, #tpu.memory_space<vmem>>, vector<1x32xf32>
    %11 = vector.broadcast %10 : vector<1x32xf32> to vector<2x32xf32>
    %12 = arith.addf %9, %11 : vector<2x32xf32>
    %c0_11 = arith.constant 0 : index
    %c0_12 = arith.constant 0 : index
    %13 = vector.load %arg8[%c0_11, %c0_12] : memref<2x32xf32, #tpu.memory_space<vmem>>, vector<2x32xf32>
    tpu.vector_store %arg8[%c0_11, %c0_12], %12 {strides = array<i32>} : memref<2x32xf32, #tpu.memory_space<vmem>>, vector<2x32xf32>,
    %c0_13 = arith.constant 0 : index
    %c0_14 = arith.constant 0 : index
    %14 = vector.load %arg3[%c0_13, %c0_14] : memref<64x64xf32, #tpu.memory_space<vmem>>, vector<64x64xf32>
    %cst_15 = arith.constant dense<0.000000e+00> : vector<2x64xf32>
    %15 = tpu.matmul %3, %14, %cst_15 {dimension_numbers = #tpu.dot_dimension_numbers<[1], [0], [0], [1], [0, 0, 1, 1], [], []>} : vector<2x64xf32>, vector<64x64xf32>, vector<2x64xf32> -> vector<2x64xf32>
    %c0_16 = arith.constant 0 : index
    %c0_17 = arith.constant 0 : index
    %16 = vector.load %arg4[%c0_16, %c0_17] : memref<32x64xf32, #tpu.memory_space<vmem>>, vector<32x64xf32>
    %cst_18 = arith.constant dense<0.000000e+00> : vector<2x64xf32>
    %17 = tpu.matmul %4, %16, %cst_18 {dimension_numbers = #tpu.dot_dimension_numbers<[1], [0], [0], [1], [0, 0, 1, 1], [], []>} : vector<2x32xf32>, vector<32x64xf32>, vector<2x64xf32> -> vector<2x64xf32>
    %18 = arith.addf %15, %17 : vector<2x64xf32>
    %c0_19 = arith.constant 0 : index
    %c0_20 = arith.constant 0 : index
    %19 = vector.load %arg9[%c0_19, %c0_20] : memref<2x64xf32, #tpu.memory_space<vmem>>, vector<2x64xf32>
    tpu.vector_store %arg9[%c0_19, %c0_20], %18 {strides = array<i32>} : memref<2x64xf32, #tpu.memory_space<vmem>>, vector<2x64xf32>,
    return
  }
  func.func @transform_0(%arg0: i32, %arg1: i32) -> (i32, i32) {
    %c0_i32 = arith.constant 0 : i32
    return %arg0, %arg1 : i32, i32
  }
  func.func @transform_1(%arg0: i32, %arg1: i32) -> (i32, i32) {
    %c0_i32 = arith.constant 0 : i32
    %c0_i32_0 = arith.constant 0 : i32
    %c0_i32_1 = arith.constant 0 : i32
    return %c0_i32, %c0_i32_0 : i32, i32
  }
  func.func @transform_2(%arg0: i32, %arg1: i32) -> (i32, i32) {
    %c0_i32 = arith.constant 0 : i32
    %c0_i32_0 = arith.constant 0 : i32
    %c0_i32_1 = arith.constant 0 : i32
    return %c0_i32, %c0_i32_0 : i32, i32
  }
  func.func @transform_3(%arg0: i32, %arg1: i32) -> (i32, i32) {
    %c0_i32 = arith.constant 0 : i32
    %c0_i32_0 = arith.constant 0 : i32
    %c0_i32_1 = arith.constant 0 : i32
    return %c0_i32, %c0_i32_0 : i32, i32
  }
  func.func @transform_4(%arg0: i32, %arg1: i32) -> (i32, i32) {
    %c0_i32 = arith.constant 0 : i32
    %c0_i32_0 = arith.constant 0 : i32
    %c0_i32_1 = arith.constant 0 : i32
    return %c0_i32, %c0_i32_0 : i32, i32
  }
  func.func @transform_5(%arg0: i32, %arg1: i32) -> (i32, i32) {
    %c0_i32 = arith.constant 0 : i32
    %c0_i32_0 = arith.constant 0 : i32
    %c0_i32_1 = arith.constant 0 : i32
    return %c0_i32, %c0_i32_0 : i32, i32
  }
  func.func @transform_6(%arg0: i32, %arg1: i32) -> (i32, i32) {
    %c0_i32 = arith.constant 0 : i32
    return %arg0, %arg1 : i32, i32
  }
}

module attributes {stable_mosaic.version = 11 : i64} {
  func.func @lssl_chunk_kernel(%arg0: i32, %arg1: i32, %arg2: memref<2x32xf32, #tpu.memory_space<vmem>>, %arg3: memref<64x64xf32, #tpu.memory_space<vmem>>, %arg4: memref<32x64xf32, #tpu.memory_space<vmem>>, %arg5: memref<64x32xf32, #tpu.memory_space<vmem>>, %arg6: memref<32x32xf32, #tpu.memory_space<vmem>>, %arg7: memref<1x32xf32, #tpu.memory_space<vmem>>, %arg8: memref<2x32xf32, #tpu.memory_space<vmem>>, %arg9: memref<2x64xf32, #tpu.memory_space<vmem>>) attributes {dimension_semantics = [#tpu.dimension_semantics<parallel>, #tpu.dimension_semantics<arbitrary>], iteration_bounds = array<i64: 1, 1>, scalar_prefetch = 0 : i64, scratch_operands = 1 : i64, tpu.core_type = #tpu.core_type<tc>, window_params = [{transform_indices = @transform_0, window_bounds = array<i64: 2, 32>}, {pipeline_mode = #tpu.pipeline_mode<synchronous>, transform_indices = @transform_1, window_bounds = array<i64: 64, 64>}, {pipeline_mode = #tpu.pipeline_mode<synchronous>, transform_indices = @transform_2, window_bounds = array<i64: 32, 64>}, {pipeline_mode = #tpu.pipeline_mode<synchronous>, transform_indices = @transform_3, window_bounds = array<i64: 64, 32>}, {pipeline_mode = #tpu.pipeline_mode<synchronous>, transform_indices = @transform_4, window_bounds = array<i64: 32, 32>}, {pipeline_mode = #tpu.pipeline_mode<synchronous>, transform_indices = @transform_5, window_bounds = array<i64: 1, 32>}, {transform_indices = @transform_6, window_bounds = array<i64: 2, 32>}]} {
    %c0_i32 = arith.constant 0 : i32
    %0 = arith.cmpi eq, %arg1, %c0_i32 : i32
    %1 = arith.extui %0 : i1 to i32
    %c0_i32_0 = arith.constant 0 : i32
    %2 = arith.cmpi ne, %1, %c0_i32_0 : i32
    scf.if %2 {
      %cst_21 = arith.constant 0.000000e+00 : f32
      %20 = vector.broadcast %cst_21 : f32 to vector<2x64xf32>
      %c0_22 = arith.constant 0 : index
      %c0_23 = arith.constant 0 : index
      %21 = vector.load %arg9[%c0_22, %c0_23] : memref<2x64xf32, #tpu.memory_space<vmem>>, vector<2x64xf32>
      tpu.vector_store %arg9[%c0_22, %c0_23], %20 {strides = array<i32>} : memref<2x64xf32, #tpu.memory_space<vmem>>, vector<2x64xf32>,
    } else {
    }
    %c0 = arith.constant 0 : index
    %c0_1 = arith.constant 0 : index
    %3 = vector.load %arg9[%c0, %c0_1] : memref<2x64xf32, #tpu.memory_space<vmem>>, vector<2x64xf32>
    %c0_2 = arith.constant 0 : index
    %c0_3 = arith.constant 0 : index
    %4 = vector.load %arg2[%c0_2, %c0_3] : memref<2x32xf32, #tpu.memory_space<vmem>>, vector<2x32xf32>
    %c0_4 = arith.constant 0 : index
    %c0_5 = arith.constant 0 : index
    %5 = vector.load %arg6[%c0_4, %c0_5] : memref<32x32xf32, #tpu.memory_space<vmem>>, vector<32x32xf32>
    %cst = arith.constant dense<0.000000e+00> : vector<2x32xf32>
    %6 = tpu.matmul %4, %5, %cst {dimension_numbers = #tpu.dot_dimension_numbers<[1], [0], [0], [1], [0, 0, 1, 1], [], []>} : vector<2x32xf32>, vector<32x32xf32>, vector<2x32xf32> -> vector<2x32xf32>
    %c0_6 = arith.constant 0 : index
    %c0_7 = arith.constant 0 : index
    %7 = vector.load %arg5[%c0_6, %c0_7] : memref<64x32xf32, #tpu.memory_space<vmem>>, vector<64x32xf32>
    %cst_8 = arith.constant dense<0.000000e+00> : vector<2x32xf32>
    %8 = tpu.matmul %3, %7, %cst_8 {dimension_numbers = #tpu.dot_dimension_numbers<[1], [0], [0], [1], [0, 0, 1, 1], [], []>} : vector<2x64xf32>, vector<64x32xf32>, vector<2x32xf32> -> vector<2x32xf32>
    %9 = arith.addf %6, %8 : vector<2x32xf32>
    %c0_9 = arith.constant 0 : index
    %c0_10 = arith.constant 0 : index
    %10 = vector.load %arg7[%c0_9, %c0_10] : memref<1x32xf32, #tpu.memory_space<vmem>>, vector<1x32xf32>
    %11 = vector.broadcast %10 : vector<1x32xf32> to vector<2x32xf32>
    %12 = arith.addf %9, %11 : vector<2x32xf32>
    %c0_11 = arith.constant 0 : index
    %c0_12 = arith.constant 0 : index
    %13 = vector.load %arg8[%c0_11, %c0_12] : memref<2x32xf32, #tpu.memory_space<vmem>>, vector<2x32xf32>
    tpu.vector_store %arg8[%c0_11, %c0_12], %12 {strides = array<i32>} : memref<2x32xf32, #tpu.memory_space<vmem>>, vector<2x32xf32>,
    %c0_13 = arith.constant 0 : index
    %c0_14 = arith.constant 0 : index
    %14 = vector.load %arg3[%c0_13, %c0_14] : memref<64x64xf32, #tpu.memory_space<vmem>>, vector<64x64xf32>
    %cst_15 = arith.constant dense<0.000000e+00> : vector<2x64xf32>
    %15 = tpu.matmul %3, %14, %cst_15 {dimension_numbers = #tpu.dot_dimension_numbers<[1], [0], [0], [1], [0, 0, 1, 1], [], []>} : vector<2x64xf32>, vector<64x64xf32>, vector<2x64xf32> -> vector<2x64xf32>
    %c0_16 = arith.constant 0 : index
    %c0_17 = arith.constant 0 : index
    %16 = vector.load %arg4[%c0_16, %c0_17] : memref<32x64xf32, #tpu.memory_space<vmem>>, vector<32x64xf32>
    %cst_18 = arith.constant dense<0.000000e+00> : vector<2x64xf32>
    %17 = tpu.matmul %4, %16, %cst_18 {dimension_numbers = #tpu.dot_dimension_numbers<[1], [0], [0], [1], [0, 0, 1, 1], [], []>} : vector<2x32xf32>, vector<32x64xf32>, vector<2x64xf32> -> vector<2x64xf32>
    %18 = arith.addf %15, %17 : vector<2x64xf32>
    %c0_19 = arith.constant 0 : index
    %c0_20 = arith.constant 0 : index
    %19 = vector.load %arg9[%c0_19, %c0_20] : memref<2x64xf32, #tpu.memory_space<vmem>>, vector<2x64xf32>
    tpu.vector_store %arg9[%c0_19, %c0_20], %18 {strides = array<i32>} : memref<2x64xf32, #tpu.memory_space<vmem>>, vector<2x64xf32>,
    return
  }
  func.func @transform_0(%arg0: i32, %arg1: i32) -> (i32, i32) {
    %c0_i32 = arith.constant 0 : i32
    return %arg0, %arg1 : i32, i32
  }
  func.func @transform_1(%arg0: i32, %arg1: i32) -> (i32, i32) {
    %c0_i32 = arith.constant 0 : i32
    %c0_i32_0 = arith.constant 0 : i32
    %c0_i32_1 = arith.constant 0 : i32
    return %c0_i32, %c0_i32_0 : i32, i32
  }
  func.func @transform_2(%arg0: i32, %arg1: i32) -> (i32, i32) {
    %c0_i32 = arith.constant 0 : i32
    %c0_i32_0 = arith.constant 0 : i32
    %c0_i32_1 = arith.constant 0 : i32
    return %c0_i32, %c0_i32_0 : i32, i32
  }
  func.func @transform_3(%arg0: i32, %arg1: i32) -> (i32, i32) {
    %c0_i32 = arith.constant 0 : i32
    %c0_i32_0 = arith.constant 0 : i32
    %c0_i32_1 = arith.constant 0 : i32
    return %c0_i32, %c0_i32_0 : i32, i32
  }
  func.func @transform_4(%arg0: i32, %arg1: i32) -> (i32, i32) {
    %c0_i32 = arith.constant 0 : i32
    %c0_i32_0 = arith.constant 0 : i32
    %c0_i32_1 = arith.constant 0 : i32
    return %c0_i32, %c0_i32_0 : i32, i32
  }
  func.func @transform_5(%arg0: i32, %arg1: i32) -> (i32, i32) {
    %c0_i32 = arith.constant 0 : i32
    %c0_i32_0 = arith.constant 0 : i32
    %c0_i32_1 = arith.constant 0 : i32
    return %c0_i32, %c0_i32_0 : i32, i32
  }
  func.func @transform_6(%arg0: i32, %arg1: i32) -> (i32, i32) {
    %c0_i32 = arith.constant 0 : i32
    return %arg0, %arg1 : i32, i32
  }
}

</mosaic_0001>

<llo_original>
// kernel: custom-call.2
$region0: #{custom-call.2}
  %s0 = inlined_call_operand.vmem [shape: f32[8,4,16,16], index: 0, kind: output, shape index: {}]

// kernel: tile.8
$region0: #{tile.8}
  #allocation0 [shape = 's32[1]{0}', space=sflag, size = 0x4, scoped, tag = 'scoped memory for tile.8']
  %s0 = inlined_call_operand.vmem [shape: f32[4], index: 0, kind: input, shape index: {}]
  %s1 = inlined_call_operand.vmem [shape: f32[8,4], index: 1, kind: output, shape index: {}]
  // Predicated region
  $region2: #{tile.8} parent=0 // pred_check
    _
  $region3: #{tile.8} parent=0 // pred_check_branch
    %3 = sbr.rel (0) target = $region5
  $region4: #{tile.8} parent=0 // pred_region
    _
  $region5: #{tile.8} parent=0 // pred_fallthru
    _
  %v4 = vld [vmem:[%s0] ss:$0 sm:$0xff]
  %5 = vst [vmem:[%s1] sm:$0xff] %v4

// kernel: tile.9
$region0: #{tile.9}
  %s0 = inlined_call_operand.vmem [shape: f32[8,4], index: 0, kind: input, shape index: {}]
  %s1 = inlined_call_operand.vmem [shape: f32[1,32], index: 1, kind: output, shape index: {}]
  $region1: #{tile.9} parent=0
    #allocation0 [shape = 'u8[4096]{0}', space=vmem, size = 0x1000, scoped, tag = 'scoped mem for output reshape']
    %v2 = vld [vmem:[%s0] sm:$0x1]
    %vm3 = vcmask 31744
    %4 = vst.msk [vmem:[#allocation0] sm:$0x1] %vm3, %v2
    %s5 = scalar_lea.vmem %s0, 7
    %v6 = vld [vmem:[%s5] sm:$0x1]
    %7 = vrot.lane.b32.xlu0 %v6, 28
    %v8 = vpop.permute.xlu0 %7
    %vm9 = vcmask 261344
    %10 = vst.msk [vmem:[#allocation0] sm:$0x1] %vm9, %v8
    %s11 = scalar_lea.vmem %s0, 6
    %v12 = vld [vmem:[%s11] sm:$0x1]
    %13 = vrot.lane.b32.xlu0 %v12, 24
    %v14 = vpop.permute.xlu0 %13
    %vm15 = vcmask 228544
    %16 = vst.msk [vmem:[#allocation0] sm:$0x1] %vm15, %v14
    %s17 = scalar_lea.vmem %s0, 5
    %v18 = vld [vmem:[%s17] sm:$0x1]
    %19 = vrot.lane.b32.xlu0 %v18, 20
    %v20 = vpop.permute.xlu0 %19
    %vm21 = vcmask 195744
    %22 = vst.msk [vmem:[#allocation0] sm:$0x1] %vm21, %v20
    %s23 = scalar_lea.vmem %s0, 4
    %v24 = vld [vmem:[%s23] sm:$0x1]
    %25 = vrot.lane.b32.xlu0 %v24, 16
    %v26 = vpop.permute.xlu0 %25
    %vm27 = vcmask 162944
    %28 = vst.msk [vmem:[#allocation0] sm:$0x1] %vm27, %v26
    %s29 = scalar_lea.vmem %s0, 3
    %v30 = vld [vmem:[%s29] sm:$0x1]
    %31 = vrot.lane.b32.xlu0 %v30, 12
    %v32 = vpop.permute.xlu0 %31
    %vm33 = vcmask 130144
    %34 = vst.msk [vmem:[#allocation0] sm:$0x1] %vm33, %v32
    %s35 = scalar_lea.vmem %s0, 2
    %v36 = vld [vmem:[%s35] sm:$0x1]
    %37 = vrot.lane.b32.xlu0 %v36, 8
    %v38 = vpop.permute.xlu0 %37
    %vm39 = vcmask 97344
    %40 = vst.msk [vmem:[#allocation0] sm:$0x1] %vm39, %v38
    %s41 = scalar_lea.vmem %s0, 1
    %v42 = vld [vmem:[%s41] sm:$0x1]
    %43 = vrot.lane.b32.xlu0 %v42, 4
    %v44 = vpop.permute.xlu0 %43
    %vm45 = vcmask 64544
    %46 = vst.msk [vmem:[#allocation0] sm:$0x1] %vm45, %v44
    %s48 = sshllo.u32 0, 1
    %v50 = vld [vmem:[#allocation0] sm:%s48]
    %s51 = sshllo.u32 0, 1
    %52 = vst [vmem:[%s1] sm:%s51] %v50

// kernel: stacked_lssl_forward.1
$region0: #{stacked_lssl_forward.1}
  #allocation0 [shape = 'u32[]', space=smem, size = 0x4, offset = 0x4, fixed_abs, tag = 'smem constant byte address 0x4 - core index']
  #allocation1 [shape = 'u32[144,128]{1,0:T(1,128)}', space=vmem, size = 0x12000, scoped, tag = 'internal scratch']
  #allocation2 [shape = 'f32[2,64]{1,0:T(2,128)}', space=vmem, size = 0x400, scoped, tag = 'scratch operand']
  %s0 = inlined_call_operand.vmem [shape: f32[2,32], index: 0, kind: input, shape index: {}]
  %s1 = inlined_call_operand.vmem [shape: f32[64,64], index: 1, kind: input, shape index: {}]
  %s2 = inlined_call_operand.vmem [shape: f32[32,64], index: 2, kind: input, shape index: {}]
  %s3 = inlined_call_operand.vmem [shape: f32[64,32], index: 3, kind: input, shape index: {}]
  %s4 = inlined_call_operand.vmem [shape: f32[32,32], index: 4, kind: input, shape index: {}]
  %s5 = inlined_call_operand.vmem [shape: f32[1,32], index: 5, kind: input, shape index: {}]
  %s6 = inlined_call_operand.vmem [shape: f32[2,32], index: 6, kind: output, shape index: {}]
  %s7 = sld [smem:[#allocation0]]
  $region38: #{stacked_lssl_forward.1} parent=0
    _
  %s9 = ssub.s32 1, %s7
  %s10 = scalar_select 0, %s9, %s7
  // Predicated region
  $region2: #{stacked_lssl_forward.1} parent=0 // pred_check
    _
  $region3: #{stacked_lssl_forward.1} parent=0 // pred_check_branch
    %12 = sbr.rel (0) target = $region5
  $region4: #{stacked_lssl_forward.1} parent=0 // pred_region
    _
  $region5: #{stacked_lssl_forward.1} parent=0 // pred_fallthru
    _
  // Predicated region
  $region6: #{stacked_lssl_forward.1} parent=0 // pred_check
    _
  $region7: #{stacked_lssl_forward.1} parent=0 // pred_check_branch
    %14 = sbr.rel (0) target = $region9
  $region8: #{stacked_lssl_forward.1} parent=0 // pred_region
    _
  $region9: #{stacked_lssl_forward.1} parent=0 // pred_fallthru
    _
  // Predicated region
  $region10: #{stacked_lssl_forward.1} parent=0 // pred_check
    _
  $region11: #{stacked_lssl_forward.1} parent=0 // pred_check_branch
    %16 = sbr.rel (0) target = $region13
  $region12: #{stacked_lssl_forward.1} parent=0 // pred_region
    _
  $region13: #{stacked_lssl_forward.1} parent=0 // pred_fallthru
    _
  // Predicated region
  $region14: #{stacked_lssl_forward.1} parent=0 // pred_check
    _
  $region15: #{stacked_lssl_forward.1} parent=0 // pred_check_branch
    %18 = sbr.rel (0) target = $region17
  $region16: #{stacked_lssl_forward.1} parent=0 // pred_region
    _
  $region17: #{stacked_lssl_forward.1} parent=0 // pred_fallthru
    _
  // Predicated region
  $region18: #{stacked_lssl_forward.1} parent=0 // pred_check
    _
  $region19: #{stacked_lssl_forward.1} parent=0 // pred_check_branch
    %20 = sbr.rel (0) target = $region21
  $region20: #{stacked_lssl_forward.1} parent=0 // pred_region
    _
  $region21: #{stacked_lssl_forward.1} parent=0 // pred_fallthru
    _
  // Predicated region
  $region22: #{stacked_lssl_forward.1} parent=0 // pred_check
    _
  $region23: #{stacked_lssl_forward.1} parent=0 // pred_check_branch
    %22 = sbr.rel (0) target = $region25
  $region24: #{stacked_lssl_forward.1} parent=0 // pred_region
    _
  $region25: #{stacked_lssl_forward.1} parent=0 // pred_fallthru
    _
  %p23 = scmp.eq.s32.totalorder 0, 0
  // Predicated region
  $region26: #{stacked_lssl_forward.1} parent=0 // pred_check
    %p24 = pneg %p23
  $region27: #{stacked_lssl_forward.1} parent=0 // pred_check_branch
    %26 = sbr.rel (%p24) target = $region29
  $region28: #{stacked_lssl_forward.1} parent=0 // pred_region
    %vm27 = vcmask 517120
    %28 = vst.msk [vmem:[#allocation2] sm:$0x3] %vm27, 0.0
  $region29: #{stacked_lssl_forward.1} parent=0 // pred_fallthru
    _
  %v29 = vld [vmem:[#allocation2] sm:$0x3]
  %v30 = vld [vmem:[%s0] sm:$0x3]
  %v31 = vld [vmem:[%s4] sm:$0xff]
  %v32 = vld [vmem:[%s4 + $0x8] sm:$0xff]
  %v33 = vld [vmem:[%s4 + $0x10] sm:$0xff]
  %v34 = vld [vmem:[%s4 + $0x18] sm:$0xff]
  %v35 = vld [vmem:[%s3] sm:$0xff]
  %v36 = vld [vmem:[%s3 + $0x8] sm:$0xff]
  %v37 = vld [vmem:[%s3 + $0x10] sm:$0xff]
  %v38 = vld [vmem:[%s3 + $0x18] sm:$0xff]
  %v39 = vld [vmem:[%s3 + $0x20] sm:$0xff]
  %v40 = vld [vmem:[%s3 + $0x28] sm:$0xff]
  %v41 = vld [vmem:[%s3 + $0x30] sm:$0xff]
  %v42 = vld [vmem:[%s3 + $0x38] sm:$0xff]
  %vm43 = vcmask 523264
  %v45 = vsel %vm43, %v29, 0
  %47 = vmatprep.subr.mxu0 0.0
  %48 = vmatpush1.msra.mxu0 %v35
  %49 = vmatprep.subr.mxu0 0.0
  %50 = vmatpush1.msra.mxu0 %v36
  %51 = vmatprep.subr.mxu0 0.0
  %52 = vmatpush1.msra.mxu0 %v37
  %53 = vmatprep.subr.mxu0 0.0
  %54 = vmatpush1.msra.mxu0 %v38
  %55 = vmatprep.subr.mxu0 0.0
  %56 = vmatpush1.msra.mxu0 %v39
  %57 = vmatprep.subr.mxu0 0.0
  %58 = vmatpush1.msra.mxu0 %v40
  %59 = vmatprep.subr.mxu0 0.0
  %60 = vmatpush1.msra.mxu0 %v41
  %61 = vmatprep.subr.mxu0 0.0
  %62 = vmatpush1.msra.mxu0 %v42
  %63 = vmatprep.subr.mxu0 0.0
  %64 = vmatpush1.msra.mxu0 0.0
  %65 = vmatprep.subr.mxu0 0.0
  %66 = vmatpush1.msra.mxu0 0.0
  %67 = vmatprep.subr.mxu0 0.0
  %68 = vmatpush1.msra.mxu0 0.0
  %69 = vmatprep.subr.mxu0 0.0
  %70 = vmatpush1.msra.mxu0 0.0
  %71 = vmatprep.subr.mxu0 0.0
  %72 = vmatpush1.msra.mxu0 0.0
  %73 = vmatprep.subr.mxu0 0.0
  %74 = vmatpush1.msra.mxu0 0.0
  %75 = vmatprep.subr.mxu0 0.0
  %76 = vmatpush1.msra.mxu0 0.0
  %77 = vmatprep.subr.mxu0 0.0
  %78 = vmatpush1.msra.mxu0 0.0
  %79 = vmatprep.subr.mxu0 0.0
  %80 = vmatpush1.msra.mxu0 0.0
  %81 = vmatprep.subr.mxu0 0.0
  %82 = vmatpush1.msra.mxu0 0.0
  %83 = vmatprep.subr.mxu0 0.0
  %84 = vmatpush1.msra.mxu0 0.0
  %85 = vmatprep.subr.mxu0 0.0
  %86 = vmatpush1.msra.mxu0 0.0
  %87 = vmatprep.subr.mxu0 0.0
  %88 = vmatpush1.msra.mxu0 0.0
  %89 = vmatprep.subr.mxu0 0.0
  %90 = vmatpush1.msra.mxu0 0.0
  %91 = vmatprep.subr.mxu0 0.0
  %92 = vmatpush1.msra.mxu0 0.0
  %93 = vmatprep.subr.mxu0 0.0
  %94 = vmatpush1.msra.mxu0 0.0
  %95 = vmatprep.subr.mxu0 0.0
  %96 = vmatpush1.msra.mxu0 0.0
  %97 = vmatprep.subr.mxu0 0.0
  %98 = vmatpush1.msra.mxu0 0.0
  %99 = vmatprep.subr.mxu0 0.0
  %100 = vmatpush1.msra.mxu0 0.0
  %101 = vmatprep.subr.mxu0 0.0
  %102 = vmatpush1.msra.mxu0 0.0
  %103 = vmatprep.subr.mxu0 0.0
  %104 = vmatpush1.msra.mxu0 0.0
  %105 = vmatprep.subr.mxu0 0.0
  %106 = vmatpush1.msra.mxu0 0.0
  %107 = vmatprep.subr.mxu0 0.0
  %108 = vmatpush1.msra.mxu0 0.0
  %109 = vmatprep.subr.mxu0 0.0
  %110 = vmatpush1.msra.mxu0 0.0
  %111 = vmatprep.mubr.f32.mxu0 0.0
  %112 = vmatmul.mubr.f32.gmra.mrb[0].mxu0 %v45
  %v113 = vpop.f32.mrb[0].mxu0
  %v114 = vadd.f32 0.0, %v113
  %v115 = vpop.f32.mrb[0].mxu0
  %116 = vdwg.mxu0
  %vm117 = vcmask 261120
  %v119 = vsel %vm117, %v30, 0
  %121 = vmatprep.subr.mxu0 0.0
  %122 = vmatpush1.msra.mxu0 %v31
  %123 = vmatprep.subr.mxu0 0.0
  %124 = vmatpush1.msra.mxu0 %v32
  %125 = vmatprep.subr.mxu0 0.0
  %126 = vmatpush1.msra.mxu0 %v33
  %127 = vmatprep.subr.mxu0 0.0
  %128 = vmatpush1.msra.mxu0 %v34
  %129 = vmatprep.subr.mxu0 0.0
  %130 = vmatpush1.msra.mxu0 0.0
  %131 = vmatprep.subr.mxu0 0.0
  %132 = vmatpush1.msra.mxu0 0.0
  %133 = vmatprep.subr.mxu0 0.0
  %134 = vmatpush1.msra.mxu0 0.0
  %135 = vmatprep.subr.mxu0 0.0
  %136 = vmatpush1.msra.mxu0 0.0
  %137 = vmatprep.subr.mxu0 0.0
  %138 = vmatpush1.msra.mxu0 0.0
  %139 = vmatprep.subr.mxu0 0.0
  %140 = vmatpush1.msra.mxu0 0.0
  %141 = vmatprep.subr.mxu0 0.0
  %142 = vmatpush1.msra.mxu0 0.0
  %143 = vmatprep.subr.mxu0 0.0
  %144 = vmatpush1.msra.mxu0 0.0
  %145 = vmatprep.subr.mxu0 0.0
  %146 = vmatpush1.msra.mxu0 0.0
  %147 = vmatprep.subr.mxu0 0.0
  %148 = vmatpush1.msra.mxu0 0.0
  %149 = vmatprep.subr.mxu0 0.0
  %150 = vmatpush1.msra.mxu0 0.0
  %151 = vmatprep.subr.mxu0 0.0
  %152 = vmatpush1.msra.mxu0 0.0
  %153 = vmatprep.subr.mxu0 0.0
  %154 = vmatpush1.msra.mxu0 0.0
  %155 = vmatprep.subr.mxu0 0.0
  %156 = vmatpush1.msra.mxu0 0.0
  %157 = vmatprep.subr.mxu0 0.0
  %158 = vmatpush1.msra.mxu0 0.0
  %159 = vmatprep.subr.mxu0 0.0
  %160 = vmatpush1.msra.mxu0 0.0
  %161 = vmatprep.subr.mxu0 0.0
  %162 = vmatpush1.msra.mxu0 0.0
  %163 = vmatprep.subr.mxu0 0.0
  %164 = vmatpush1.msra.mxu0 0.0
  %165 = vmatprep.subr.mxu0 0.0
  %166 = vmatpush1.msra.mxu0 0.0
  %167 = vmatprep.subr.mxu0 0.0
  %168 = vmatpush1.msra.mxu0 0.0
  %169 = vmatprep.subr.mxu0 0.0
  %170 = vmatpush1.msra.mxu0 0.0
  %171 = vmatprep.subr.mxu0 0.0
  %172 = vmatpush1.msra.mxu0 0.0
  %173 = vmatprep.subr.mxu0 0.0
  %174 = vmatpush1.msra.mxu0 0.0
  %175 = vmatprep.subr.mxu0 0.0
  %176 = vmatpush1.msra.mxu0 0.0
  %177 = vmatprep.subr.mxu0 0.0
  %178 = vmatpush1.msra.mxu0 0.0
  %179 = vmatprep.subr.mxu0 0.0
  %180 = vmatpush1.msra.mxu0 0.0
  %181 = vmatprep.subr.mxu0 0.0
  %182 = vmatpush1.msra.mxu0 0.0
  %183 = vmatprep.subr.mxu0 0.0
  %184 = vmatpush1.msra.mxu0 0.0
  %185 = vmatprep.mubr.f32.mxu0 0.0
  %186 = vmatmul.mubr.f32.gmra.mrb[0].mxu0 %v119
  %v187 = vpop.f32.mrb[0].mxu0
  %v188 = vadd.f32 %v114, %v187
  %v189 = vpop.f32.mrb[0].mxu0
  %190 = vdwg.mxu0
  %v191 = vld [vmem:[%s5] sm:$0x1]
  %v193 = vlaneseq
  %v194 = vshrl.u32 %v193, 7
  %v195 = vsub.s32 0, %v194
  %v196 = vrot.slane %v191, %v195
  %v198 = vadd.f32 %v188, %v196
  %vm199 = vcmask 254976
  %200 = vst.msk [vmem:[%s6] sm:$0x3] %vm199, %v198
  %v201 = vld [vmem:[%s1] sm:$0xff]
  %v202 = vld [vmem:[%s1 + $0x8] sm:$0xff]
  %v203 = vld [vmem:[%s1 + $0x10] sm:$0xff]
  %v204 = vld [vmem:[%s1 + $0x18] sm:$0xff]
  %v205 = vld [vmem:[%s1 + $0x20] sm:$0xff]
  %v206 = vld [vmem:[%s1 + $0x28] sm:$0xff]
  %v207 = vld [vmem:[%s1 + $0x30] sm:$0xff]
  %v208 = vld [vmem:[%s1 + $0x38] sm:$0xff]
  %v209 = vld [vmem:[%s2] sm:$0xff]
  %v210 = vld [vmem:[%s2 + $0x8] sm:$0xff]
  %v211 = vld [vmem:[%s2 + $0x10] sm:$0xff]
  %v212 = vld [vmem:[%s2 + $0x18] sm:$0xff]
  %213 = vmatprep.subr.mxu0 0.0
  %214 = vmatpush1.msra.mxu0 %v209
  %215 = vmatprep.subr.mxu0 0.0
  %216 = vmatpush1.msra.mxu0 %v210
  %217 = vmatprep.subr.mxu0 0.0
  %218 = vmatpush1.msra.mxu0 %v211
  %219 = vmatprep.subr.mxu0 0.0
  %220 = vmatpush1.msra.mxu0 %v212
  %221 = vmatprep.subr.mxu0 0.0
  %222 = vmatpush1.msra.mxu0 0.0
  %223 = vmatprep.subr.mxu0 0.0
  %224 = vmatpush1.msra.mxu0 0.0
  %225 = vmatprep.subr.mxu0 0.0
  %226 = vmatpush1.msra.mxu0 0.0
  %227 = vmatprep.subr.mxu0 0.0
  %228 = vmatpush1.msra.mxu0 0.0
  %229 = vmatprep.subr.mxu0 0.0
  %230 = vmatpush1.msra.mxu0 0.0
  %231 = vmatprep.subr.mxu0 0.0
  %232 = vmatpush1.msra.mxu0 0.0
  %233 = vmatprep.subr.mxu0 0.0
  %234 = vmatpush1.msra.mxu0 0.0
  %235 = vmatprep.subr.mxu0 0.0
  %236 = vmatpush1.msra.mxu0 0.0
  %237 = vmatprep.subr.mxu0 0.0
  %238 = vmatpush1.msra.mxu0 0.0
  %239 = vmatprep.subr.mxu0 0.0
  %240 = vmatpush1.msra.mxu0 0.0
  %241 = vmatprep.subr.mxu0 0.0
  %242 = vmatpush1.msra.mxu0 0.0
  %243 = vmatprep.subr.mxu0 0.0
  %244 = vmatpush1.msra.mxu0 0.0
  %245 = vmatprep.subr.mxu0 0.0
  %246 = vmatpush1.msra.mxu0 0.0
  %247 = vmatprep.subr.mxu0 0.0
  %248 = vmatpush1.msra.mxu0 0.0
  %249 = vmatprep.subr.mxu0 0.0
  %250 = vmatpush1.msra.mxu0 0.0
  %251 = vmatprep.subr.mxu0 0.0
  %252 = vmatpush1.msra.mxu0 0.0
  %253 = vmatprep.subr.mxu0 0.0
  %254 = vmatpush1.msra.mxu0 0.0
  %255 = vmatprep.subr.mxu0 0.0
  %256 = vmatpush1.msra.mxu0 0.0
  %257 = vmatprep.subr.mxu0 0.0
  %258 = vmatpush1.msra.mxu0 0.0
  %259 = vmatprep.subr.mxu0 0.0
  %260 = vmatpush1.msra.mxu0 0.0
  %261 = vmatprep.subr.mxu0 0.0
  %262 = vmatpush1.msra.mxu0 0.0
  %263 = vmatprep.subr.mxu0 0.0
  %264 = vmatpush1.msra.mxu0 0.0
  %265 = vmatprep.subr.mxu0 0.0
  %266 = vmatpush1.msra.mxu0 0.0
  %267 = vmatprep.subr.mxu0 0.0
  %268 = vmatpush1.msra.mxu0 0.0
  %269 = vmatprep.subr.mxu0 0.0
  %270 = vmatpush1.msra.mxu0 0.0
  %271 = vmatprep.subr.mxu0 0.0
  %272 = vmatpush1.msra.mxu0 0.0
  %273 = vmatprep.subr.mxu0 0.0
  %274 = vmatpush1.msra.mxu0 0.0
  %275 = vmatprep.subr.mxu0 0.0
  %276 = vmatpush1.msra.mxu0 0.0
  %277 = vmatprep.mubr.f32.mxu0 0.0
  %278 = vmatmul.mubr.f32.gmra.mrb[0].mxu0 %v119
  %v279 = vpop.f32.mrb[0].mxu0
  %v280 = vadd.f32 0.0, %v279
  %v281 = vpop.f32.mrb[0].mxu0
  %282 = vdwg.mxu0
  %283 = vmatprep.subr.mxu0 0.0
  %284 = vmatpush1.msra.mxu0 %v201
  %285 = vmatprep.subr.mxu0 0.0
  %286 = vmatpush1.msra.mxu0 %v202
  %287 = vmatprep.subr.mxu0 0.0
  %288 = vmatpush1.msra.mxu0 %v203
  %289 = vmatprep.subr.mxu0 0.0
  %290 = vmatpush1.msra.mxu0 %v204
  %291 = vmatprep.subr.mxu0 0.0
  %292 = vmatpush1.msra.mxu0 %v205
  %293 = vmatprep.subr.mxu0 0.0
  %294 = vmatpush1.msra.mxu0 %v206
  %295 = vmatprep.subr.mxu0 0.0
  %296 = vmatpush1.msra.mxu0 %v207
  %297 = vmatprep.subr.mxu0 0.0
  %298 = vmatpush1.msra.mxu0 %v208
  %299 = vmatprep.subr.mxu0 0.0
  %300 = vmatpush1.msra.mxu0 0.0
  %301 = vmatprep.subr.mxu0 0.0
  %302 = vmatpush1.msra.mxu0 0.0
  %303 = vmatprep.subr.mxu0 0.0
  %304 = vmatpush1.msra.mxu0 0.0
  %305 = vmatprep.subr.mxu0 0.0
  %306 = vmatpush1.msra.mxu0 0.0
  %307 = vmatprep.subr.mxu0 0.0
  %308 = vmatpush1.msra.mxu0 0.0
  %309 = vmatprep.subr.mxu0 0.0
  %310 = vmatpush1.msra.mxu0 0.0
  %311 = vmatprep.subr.mxu0 0.0
  %312 = vmatpush1.msra.mxu0 0.0
  %313 = vmatprep.subr.mxu0 0.0
  %314 = vmatpush1.msra.mxu0 0.0
  %315 = vmatprep.subr.mxu0 0.0
  %316 = vmatpush1.msra.mxu0 0.0
  %317 = vmatprep.subr.mxu0 0.0
  %318 = vmatpush1.msra.mxu0 0.0
  %319 = vmatprep.subr.mxu0 0.0
  %320 = vmatpush1.msra.mxu0 0.0
  %321 = vmatprep.subr.mxu0 0.0
  %322 = vmatpush1.msra.mxu0 0.0
  %323 = vmatprep.subr.mxu0 0.0
  %324 = vmatpush1.msra.mxu0 0.0
  %325 = vmatprep.subr.mxu0 0.0
  %326 = vmatpush1.msra.mxu0 0.0
  %327 = vmatprep.subr.mxu0 0.0
  %328 = vmatpush1.msra.mxu0 0.0
  %329 = vmatprep.subr.mxu0 0.0
  %330 = vmatpush1.msra.mxu0 0.0
  %331 = vmatprep.subr.mxu0 0.0
  %332 = vmatpush1.msra.mxu0 0.0
  %333 = vmatprep.subr.mxu0 0.0
  %334 = vmatpush1.msra.mxu0 0.0
  %335 = vmatprep.subr.mxu0 0.0
  %336 = vmatpush1.msra.mxu0 0.0
  %337 = vmatprep.subr.mxu0 0.0
  %338 = vmatpush1.msra.mxu0 0.0
  %339 = vmatprep.subr.mxu0 0.0
  %340 = vmatpush1.msra.mxu0 0.0
  %341 = vmatprep.subr.mxu0 0.0
  %342 = vmatpush1.msra.mxu0 0.0
  %343 = vmatprep.subr.mxu0 0.0
  %344 = vmatpush1.msra.mxu0 0.0
  %345 = vmatprep.subr.mxu0 0.0
  %346 = vmatpush1.msra.mxu0 0.0
  %347 = vmatprep.mubr.f32.mxu0 0.0
  %348 = vmatmul.mubr.f32.gmra.mrb[0].mxu0 %v45
  %v349 = vpop.f32.mrb[0].mxu0
  %v350 = vadd.f32 %v280, %v349
  %v351 = vpop.f32.mrb[0].mxu0
  %352 = vdwg.mxu0
  %vm353 = vcmask 517120
  %354 = vst.msk [vmem:[#allocation2] sm:$0x3] %vm353, %v350
  // Predicated region
  $region30: #{stacked_lssl_forward.1} parent=0 // pred_check
    _
  $region31: #{stacked_lssl_forward.1} parent=0 // pred_check_branch
    %356 = sbr.rel (0) target = $region33
  $region32: #{stacked_lssl_forward.1} parent=0 // pred_region
    _
  $region33: #{stacked_lssl_forward.1} parent=0 // pred_fallthru
    _
  // Predicated region
  $region34: #{stacked_lssl_forward.1} parent=0 // pred_check
    _
  $region35: #{stacked_lssl_forward.1} parent=0 // pred_check_branch
    %358 = sbr.rel (0) target = $region37
  $region36: #{stacked_lssl_forward.1} parent=0 // pred_region
    _
  $region37: #{stacked_lssl_forward.1} parent=0 // pred_fallthru
    _

// kernel: custom-call.2
$region0: #{custom-call.2}
  %s0 = inlined_call_operand.vmem [shape: f32[8,4,16,16], index: 0, kind: output, shape index: {}]

// kernel: tile.8
$region0: #{tile.8}
  #allocation0 [shape = 's32[1]{0}', space=sflag, size = 0x4, scoped, tag = 'scoped memory for tile.8']
  %s0 = inlined_call_operand.vmem [shape: f32[4], index: 0, kind: input, shape index: {}]
  %s1 = inlined_call_operand.vmem [shape: f32[8,4], index: 1, kind: output, shape index: {}]
  // Predicated region
  $region2: #{tile.8} parent=0 // pred_check
    _
  $region3: #{tile.8} parent=0 // pred_check_branch
    %3 = sbr.rel (0) target = $region5
  $region4: #{tile.8} parent=0 // pred_region
    _
  $region5: #{tile.8} parent=0 // pred_fallthru
    _
  %v4 = vld [vmem:[%s0] ss:$0 sm:$0xff]
  %5 = vst [vmem:[%s1] sm:$0xff] %v4

// kernel: tile.9
$region0: #{tile.9}
  %s0 = inlined_call_operand.vmem [shape: f32[8,4], index: 0, kind: input, shape index: {}]
  %s1 = inlined_call_operand.vmem [shape: f32[1,32], index: 1, kind: output, shape index: {}]
  $region1: #{tile.9} parent=0
    #allocation0 [shape = 'u8[4096]{0}', space=vmem, size = 0x1000, scoped, tag = 'scoped mem for output reshape']
    %v2 = vld [vmem:[%s0] sm:$0x1]
    %vm3 = vcmask 31744
    %4 = vst.msk [vmem:[#allocation0] sm:$0x1] %vm3, %v2
    %s5 = scalar_lea.vmem %s0, 7
    %v6 = vld [vmem:[%s5] sm:$0x1]
    %7 = vrot.lane.b32.xlu0 %v6, 28
    %v8 = vpop.permute.xlu0 %7
    %vm9 = vcmask 261344
    %10 = vst.msk [vmem:[#allocation0] sm:$0x1] %vm9, %v8
    %s11 = scalar_lea.vmem %s0, 6
    %v12 = vld [vmem:[%s11] sm:$0x1]
    %13 = vrot.lane.b32.xlu0 %v12, 24
    %v14 = vpop.permute.xlu0 %13
    %vm15 = vcmask 228544
    %16 = vst.msk [vmem:[#allocation0] sm:$0x1] %vm15, %v14
    %s17 = scalar_lea.vmem %s0, 5
    %v18 = vld [vmem:[%s17] sm:$0x1]
    %19 = vrot.lane.b32.xlu0 %v18, 20
    %v20 = vpop.permute.xlu0 %19
    %vm21 = vcmask 195744
    %22 = vst.msk [vmem:[#allocation0] sm:$0x1] %vm21, %v20
    %s23 = scalar_lea.vmem %s0, 4
    %v24 = vld [vmem:[%s23] sm:$0x1]
    %25 = vrot.lane.b32.xlu0 %v24, 16
    %v26 = vpop.permute.xlu0 %25
    %vm27 = vcmask 162944
    %28 = vst.msk [vmem:[#allocation0] sm:$0x1] %vm27, %v26
    %s29 = scalar_lea.vmem %s0, 3
    %v30 = vld [vmem:[%s29] sm:$0x1]
    %31 = vrot.lane.b32.xlu0 %v30, 12
    %v32 = vpop.permute.xlu0 %31
    %vm33 = vcmask 130144
    %34 = vst.msk [vmem:[#allocation0] sm:$0x1] %vm33, %v32
    %s35 = scalar_lea.vmem %s0, 2
    %v36 = vld [vmem:[%s35] sm:$0x1]
    %37 = vrot.lane.b32.xlu0 %v36, 8
    %v38 = vpop.permute.xlu0 %37
    %vm39 = vcmask 97344
    %40 = vst.msk [vmem:[#allocation0] sm:$0x1] %vm39, %v38
    %s41 = scalar_lea.vmem %s0, 1
    %v42 = vld [vmem:[%s41] sm:$0x1]
    %43 = vrot.lane.b32.xlu0 %v42, 4
    %v44 = vpop.permute.xlu0 %43
    %vm45 = vcmask 64544
    %46 = vst.msk [vmem:[#allocation0] sm:$0x1] %vm45, %v44
    %s48 = sshllo.u32 0, 1
    %v50 = vld [vmem:[#allocation0] sm:%s48]
    %s51 = sshllo.u32 0, 1
    %52 = vst [vmem:[%s1] sm:%s51] %v50

// kernel: stacked_lssl_forward.1
$region0: #{stacked_lssl_forward.1}
  #allocation0 [shape = 'u32[]', space=smem, size = 0x4, offset = 0x4, fixed_abs, tag = 'smem constant byte address 0x4 - core index']
  #allocation1 [shape = 'u32[144,128]{1,0:T(1,128)}', space=vmem, size = 0x12000, scoped, tag = 'internal scratch']
  #allocation2 [shape = 'f32[2,64]{1,0:T(2,128)}', space=vmem, size = 0x400, scoped, tag = 'scratch operand']
  %s0 = inlined_call_operand.vmem [shape: f32[2,32], index: 0, kind: input, shape index: {}]
  %s1 = inlined_call_operand.vmem [shape: f32[64,64], index: 1, kind: input, shape index: {}]
  %s2 = inlined_call_operand.vmem [shape: f32[32,64], index: 2, kind: input, shape index: {}]
  %s3 = inlined_call_operand.vmem [shape: f32[64,32], index: 3, kind: input, shape index: {}]
  %s4 = inlined_call_operand.vmem [shape: f32[32,32], index: 4, kind: input, shape index: {}]
  %s5 = inlined_call_operand.vmem [shape: f32[1,32], index: 5, kind: input, shape index: {}]
  %s6 = inlined_call_operand.vmem [shape: f32[2,32], index: 6, kind: output, shape index: {}]
  %s7 = sld [smem:[#allocation0]]
  $region38: #{stacked_lssl_forward.1} parent=0
    _
  %s9 = ssub.s32 1, %s7
  %s10 = scalar_select 0, %s9, %s7
  // Predicated region
  $region2: #{stacked_lssl_forward.1} parent=0 // pred_check
    _
  $region3: #{stacked_lssl_forward.1} parent=0 // pred_check_branch
    %12 = sbr.rel (0) target = $region5
  $region4: #{stacked_lssl_forward.1} parent=0 // pred_region
    _
  $region5: #{stacked_lssl_forward.1} parent=0 // pred_fallthru
    _
  // Predicated region
  $region6: #{stacked_lssl_forward.1} parent=0 // pred_check
    _
  $region7: #{stacked_lssl_forward.1} parent=0 // pred_check_branch
    %14 = sbr.rel (0) target = $region9
  $region8: #{stacked_lssl_forward.1} parent=0 // pred_region
    _
  $region9: #{stacked_lssl_forward.1} parent=0 // pred_fallthru
    _
  // Predicated region
  $region10: #{stacked_lssl_forward.1} parent=0 // pred_check
    _
  $region11: #{stacked_lssl_forward.1} parent=0 // pred_check_branch
    %16 = sbr.rel (0) target = $region13
  $region12: #{stacked_lssl_forward.1} parent=0 // pred_region
    _
  $region13: #{stacked_lssl_forward.1} parent=0 // pred_fallthru
    _
  // Predicated region
  $region14: #{stacked_lssl_forward.1} parent=0 // pred_check
    _
  $region15: #{stacked_lssl_forward.1} parent=0 // pred_check_branch
    %18 = sbr.rel (0) target = $region17
  $region16: #{stacked_lssl_forward.1} parent=0 // pred_region
    _
  $region17: #{stacked_lssl_forward.1} parent=0 // pred_fallthru
    _
  // Predicated region
  $region18: #{stacked_lssl_forward.1} parent=0 // pred_check
    _
  $region19: #{stacked_lssl_forward.1} parent=0 // pred_check_branch
    %20 = sbr.rel (0) target = $region21
  $region20: #{stacked_lssl_forward.1} parent=0 // pred_region
    _
  $region21: #{stacked_lssl_forward.1} parent=0 // pred_fallthru
    _
  // Predicated region
  $region22: #{stacked_lssl_forward.1} parent=0 // pred_check
    _
  $region23: #{stacked_lssl_forward.1} parent=0 // pred_check_branch
    %22 = sbr.rel (0) target = $region25
  $region24: #{stacked_lssl_forward.1} parent=0 // pred_region
    _
  $region25: #{stacked_lssl_forward.1} parent=0 // pred_fallthru
    _
  %p23 = scmp.eq.s32.totalorder 0, 0
  // Predicated region
  $region26: #{stacked_lssl_forward.1} parent=0 // pred_check
    %p24 = pneg %p23
  $region27: #{stacked_lssl_forward.1} parent=0 // pred_check_branch
    %26 = sbr.rel (%p24) target = $region29
  $region28: #{stacked_lssl_forward.1} parent=0 // pred_region
    %vm27 = vcmask 517120
    %28 = vst.msk [vmem:[#allocation2] sm:$0x3] %vm27, 0.0
  $region29: #{stacked_lssl_forward.1} parent=0 // pred_fallthru
    _
  %v29 = vld [vmem:[#allocation2] sm:$0x3]
  %v30 = vld [vmem:[%s0] sm:$0x3]
  %v31 = vld [vmem:[%s4] sm:$0xff]
  %v32 = vld [vmem:[%s4 + $0x8] sm:$0xff]
  %v33 = vld [vmem:[%s4 + $0x10] sm:$0xff]
  %v34 = vld [vmem:[%s4 + $0x18] sm:$0xff]
  %v35 = vld [vmem:[%s3] sm:$0xff]
  %v36 = vld [vmem:[%s3 + $0x8] sm:$0xff]
  %v37 = vld [vmem:[%s3 + $0x10] sm:$0xff]
  %v38 = vld [vmem:[%s3 + $0x18] sm:$0xff]
  %v39 = vld [vmem:[%s3 + $0x20] sm:$0xff]
  %v40 = vld [vmem:[%s3 + $0x28] sm:$0xff]
  %v41 = vld [vmem:[%s3 + $0x30] sm:$0xff]
  %v42 = vld [vmem:[%s3 + $0x38] sm:$0xff]
  %vm43 = vcmask 523264
  %v45 = vsel %vm43, %v29, 0
  %47 = vmatprep.subr.mxu0 0.0
  %48 = vmatpush1.msra.mxu0 %v35
  %49 = vmatprep.subr.mxu0 0.0
  %50 = vmatpush1.msra.mxu0 %v36
  %51 = vmatprep.subr.mxu0 0.0
  %52 = vmatpush1.msra.mxu0 %v37
  %53 = vmatprep.subr.mxu0 0.0
  %54 = vmatpush1.msra.mxu0 %v38
  %55 = vmatprep.subr.mxu0 0.0
  %56 = vmatpush1.msra.mxu0 %v39
  %57 = vmatprep.subr.mxu0 0.0
  %58 = vmatpush1.msra.mxu0 %v40
  %59 = vmatprep.subr.mxu0 0.0
  %60 = vmatpush1.msra.mxu0 %v41
  %61 = vmatprep.subr.mxu0 0.0
  %62 = vmatpush1.msra.mxu0 %v42
  %63 = vmatprep.subr.mxu0 0.0
  %64 = vmatpush1.msra.mxu0 0.0
  %65 = vmatprep.subr.mxu0 0.0
  %66 = vmatpush1.msra.mxu0 0.0
  %67 = vmatprep.subr.mxu0 0.0
  %68 = vmatpush1.msra.mxu0 0.0
  %69 = vmatprep.subr.mxu0 0.0
  %70 = vmatpush1.msra.mxu0 0.0
  %71 = vmatprep.subr.mxu0 0.0
  %72 = vmatpush1.msra.mxu0 0.0
  %73 = vmatprep.subr.mxu0 0.0
  %74 = vmatpush1.msra.mxu0 0.0
  %75 = vmatprep.subr.mxu0 0.0
  %76 = vmatpush1.msra.mxu0 0.0
  %77 = vmatprep.subr.mxu0 0.0
  %78 = vmatpush1.msra.mxu0 0.0
  %79 = vmatprep.subr.mxu0 0.0
  %80 = vmatpush1.msra.mxu0 0.0
  %81 = vmatprep.subr.mxu0 0.0
  %82 = vmatpush1.msra.mxu0 0.0
  %83 = vmatprep.subr.mxu0 0.0
  %84 = vmatpush1.msra.mxu0 0.0
  %85 = vmatprep.subr.mxu0 0.0
  %86 = vmatpush1.msra.mxu0 0.0
  %87 = vmatprep.subr.mxu0 0.0
  %88 = vmatpush1.msra.mxu0 0.0
  %89 = vmatprep.subr.mxu0 0.0
  %90 = vmatpush1.msra.mxu0 0.0
  %91 = vmatprep.subr.mxu0 0.0
  %92 = vmatpush1.msra.mxu0 0.0
  %93 = vmatprep.subr.mxu0 0.0
  %94 = vmatpush1.msra.mxu0 0.0
  %95 = vmatprep.subr.mxu0 0.0
  %96 = vmatpush1.msra.mxu0 0.0
  %97 = vmatprep.subr.mxu0 0.0
  %98 = vmatpush1.msra.mxu0 0.0
  %99 = vmatprep.subr.mxu0 0.0
  %100 = vmatpush1.msra.mxu0 0.0
  %101 = vmatprep.subr.mxu0 0.0
  %102 = vmatpush1.msra.mxu0 0.0
  %103 = vmatprep.subr.mxu0 0.0
  %104 = vmatpush1.msra.mxu0 0.0
  %105 = vmatprep.subr.mxu0 0.0
  %106 = vmatpush1.msra.mxu0 0.0
  %107 = vmatprep.subr.mxu0 0.0
  %108 = vmatpush1.msra.mxu0 0.0
  %109 = vmatprep.subr.mxu0 0.0
  %110 = vmatpush1.msra.mxu0 0.0
  %111 = vmatprep.mubr.f32.mxu0 0.0
  %112 = vmatmul.mubr.f32.gmra.mrb[0].mxu0 %v45
  %v113 = vpop.f32.mrb[0].mxu0
  %v114 = vadd.f32 0.0, %v113
  %v115 = vpop.f32.mrb[0].mxu0
  %116 = vdwg.mxu0
  %vm117 = vcmask 261120
  %v119 = vsel %vm117, %v30, 0
  %121 = vmatprep.subr.mxu0 0.0
  %122 = vmatpush1.msra.mxu0 %v31
  %123 = vmatprep.subr.mxu0 0.0
  %124 = vmatpush1.msra.mxu0 %v32
  %125 = vmatprep.subr.mxu0 0.0
  %126 = vmatpush1.msra.mxu0 %v33
  %127 = vmatprep.subr.mxu0 0.0
  %128 = vmatpush1.msra.mxu0 %v34
  %129 = vmatprep.subr.mxu0 0.0
  %130 = vmatpush1.msra.mxu0 0.0
  %131 = vmatprep.subr.mxu0 0.0
  %132 = vmatpush1.msra.mxu0 0.0
  %133 = vmatprep.subr.mxu0 0.0
  %134 = vmatpush1.msra.mxu0 0.0
  %135 = vmatprep.subr.mxu0 0.0
  %136 = vmatpush1.msra.mxu0 0.0
  %137 = vmatprep.subr.mxu0 0.0
  %138 = vmatpush1.msra.mxu0 0.0
  %139 = vmatprep.subr.mxu0 0.0
  %140 = vmatpush1.msra.mxu0 0.0
  %141 = vmatprep.subr.mxu0 0.0
  %142 = vmatpush1.msra.mxu0 0.0
  %143 = vmatprep.subr.mxu0 0.0
  %144 = vmatpush1.msra.mxu0 0.0
  %145 = vmatprep.subr.mxu0 0.0
  %146 = vmatpush1.msra.mxu0 0.0
  %147 = vmatprep.subr.mxu0 0.0
  %148 = vmatpush1.msra.mxu0 0.0
  %149 = vmatprep.subr.mxu0 0.0
  %150 = vmatpush1.msra.mxu0 0.0
  %151 = vmatprep.subr.mxu0 0.0
  %152 = vmatpush1.msra.mxu0 0.0
  %153 = vmatprep.subr.mxu0 0.0
  %154 = vmatpush1.msra.mxu0 0.0
  %155 = vmatprep.subr.mxu0 0.0
  %156 = vmatpush1.msra.mxu0 0.0
  %157 = vmatprep.subr.mxu0 0.0
  %158 = vmatpush1.msra.mxu0 0.0
  %159 = vmatprep.subr.mxu0 0.0
  %160 = vmatpush1.msra.mxu0 0.0
  %161 = vmatprep.subr.mxu0 0.0
  %162 = vmatpush1.msra.mxu0 0.0
  %163 = vmatprep.subr.mxu0 0.0
  %164 = vmatpush1.msra.mxu0 0.0
  %165 = vmatprep.subr.mxu0 0.0
  %166 = vmatpush1.msra.mxu0 0.0
  %167 = vmatprep.subr.mxu0 0.0
  %168 = vmatpush1.msra.mxu0 0.0
  %169 = vmatprep.subr.mxu0 0.0
  %170 = vmatpush1.msra.mxu0 0.0
  %171 = vmatprep.subr.mxu0 0.0
  %172 = vmatpush1.msra.mxu0 0.0
  %173 = vmatprep.subr.mxu0 0.0
  %174 = vmatpush1.msra.mxu0 0.0
  %175 = vmatprep.subr.mxu0 0.0
  %176 = vmatpush1.msra.mxu0 0.0
  %177 = vmatprep.subr.mxu0 0.0
  %178 = vmatpush1.msra.mxu0 0.0
  %179 = vmatprep.subr.mxu0 0.0
  %180 = vmatpush1.msra.mxu0 0.0
  %181 = vmatprep.subr.mxu0 0.0
  %182 = vmatpush1.msra.mxu0 0.0
  %183 = vmatprep.subr.mxu0 0.0
  %184 = vmatpush1.msra.mxu0 0.0
  %185 = vmatprep.mubr.f32.mxu0 0.0
  %186 = vmatmul.mubr.f32.gmra.mrb[0].mxu0 %v119
  %v187 = vpop.f32.mrb[0].mxu0
  %v188 = vadd.f32 %v114, %v187
  %v189 = vpop.f32.mrb[0].mxu0
  %190 = vdwg.mxu0
  %v191 = vld [vmem:[%s5] sm:$0x1]
  %v193 = vlaneseq
  %v194 = vshrl.u32 %v193, 7
  %v195 = vsub.s32 0, %v194
  %v196 = vrot.slane %v191, %v195
  %v198 = vadd.f32 %v188, %v196
  %vm199 = vcmask 254976
  %200 = vst.msk [vmem:[%s6] sm:$0x3] %vm199, %v198
  %v201 = vld [vmem:[%s1] sm:$0xff]
  %v202 = vld [vmem:[%s1 + $0x8] sm:$0xff]
  %v203 = vld [vmem:[%s1 + $0x10] sm:$0xff]
  %v204 = vld [vmem:[%s1 + $0x18] sm:$0xff]
  %v205 = vld [vmem:[%s1 + $0x20] sm:$0xff]
  %v206 = vld [vmem:[%s1 + $0x28] sm:$0xff]
  %v207 = vld [vmem:[%s1 + $0x30] sm:$0xff]
  %v208 = vld [vmem:[%s1 + $0x38] sm:$0xff]
  %v209 = vld [vmem:[%s2] sm:$0xff]
  %v210 = vld [vmem:[%s2 + $0x8] sm:$0xff]
  %v211 = vld [vmem:[%s2 + $0x10] sm:$0xff]
  %v212 = vld [vmem:[%s2 + $0x18] sm:$0xff]
  %213 = vmatprep.subr.mxu0 0.0
  %214 = vmatpush1.msra.mxu0 %v209
  %215 = vmatprep.subr.mxu0 0.0
  %216 = vmatpush1.msra.mxu0 %v210
  %217 = vmatprep.subr.mxu0 0.0
  %218 = vmatpush1.msra.mxu0 %v211
  %219 = vmatprep.subr.mxu0 0.0
  %220 = vmatpush1.msra.mxu0 %v212
  %221 = vmatprep.subr.mxu0 0.0
  %222 = vmatpush1.msra.mxu0 0.0
  %223 = vmatprep.subr.mxu0 0.0
  %224 = vmatpush1.msra.mxu0 0.0
  %225 = vmatprep.subr.mxu0 0.0
  %226 = vmatpush1.msra.mxu0 0.0
  %227 = vmatprep.subr.mxu0 0.0
  %228 = vmatpush1.msra.mxu0 0.0
  %229 = vmatprep.subr.mxu0 0.0
  %230 = vmatpush1.msra.mxu0 0.0
  %231 = vmatprep.subr.mxu0 0.0
  %232 = vmatpush1.msra.mxu0 0.0
  %233 = vmatprep.subr.mxu0 0.0
  %234 = vmatpush1.msra.mxu0 0.0
  %235 = vmatprep.subr.mxu0 0.0
  %236 = vmatpush1.msra.mxu0 0.0
  %237 = vmatprep.subr.mxu0 0.0
  %238 = vmatpush1.msra.mxu0 0.0
  %239 = vmatprep.subr.mxu0 0.0
  %240 = vmatpush1.msra.mxu0 0.0
  %241 = vmatprep.subr.mxu0 0.0
  %242 = vmatpush1.msra.mxu0 0.0
  %243 = vmatprep.subr.mxu0 0.0
  %244 = vmatpush1.msra.mxu0 0.0
  %245 = vmatprep.subr.mxu0 0.0
  %246 = vmatpush1.msra.mxu0 0.0
  %247 = vmatprep.subr.mxu0 0.0
  %248 = vmatpush1.msra.mxu0 0.0
  %249 = vmatprep.subr.mxu0 0.0
  %250 = vmatpush1.msra.mxu0 0.0
  %251 = vmatprep.subr.mxu0 0.0
  %252 = vmatpush1.msra.mxu0 0.0
  %253 = vmatprep.subr.mxu0 0.0
  %254 = vmatpush1.msra.mxu0 0.0
  %255 = vmatprep.subr.mxu0 0.0
  %256 = vmatpush1.msra.mxu0 0.0
  %257 = vmatprep.subr.mxu0 0.0
  %258 = vmatpush1.msra.mxu0 0.0
  %259 = vmatprep.subr.mxu0 0.0
  %260 = vmatpush1.msra.mxu0 0.0
  %261 = vmatprep.subr.mxu0 0.0
  %262 = vmatpush1.msra.mxu0 0.0
  %263 = vmatprep.subr.mxu0 0.0
  %264 = vmatpush1.msra.mxu0 0.0
  %265 = vmatprep.subr.mxu0 0.0
  %266 = vmatpush1.msra.mxu0 0.0
  %267 = vmatprep.subr.mxu0 0.0
  %268 = vmatpush1.msra.mxu0 0.0
  %269 = vmatprep.subr.mxu0 0.0
  %270 = vmatpush1.msra.mxu0 0.0
  %271 = vmatprep.subr.mxu0 0.0
  %272 = vmatpush1.msra.mxu0 0.0
  %273 = vmatprep.subr.mxu0 0.0
  %274 = vmatpush1.msra.mxu0 0.0
  %275 = vmatprep.subr.mxu0 0.0
  %276 = vmatpush1.msra.mxu0 0.0
  %277 = vmatprep.mubr.f32.mxu0 0.0
  %278 = vmatmul.mubr.f32.gmra.mrb[0].mxu0 %v119
  %v279 = vpop.f32.mrb[0].mxu0
  %v280 = vadd.f32 0.0, %v279
  %v281 = vpop.f32.mrb[0].mxu0
  %282 = vdwg.mxu0
  %283 = vmatprep.subr.mxu0 0.0
  %284 = vmatpush1.msra.mxu0 %v201
  %285 = vmatprep.subr.mxu0 0.0
  %286 = vmatpush1.msra.mxu0 %v202
  %287 = vmatprep.subr.mxu0 0.0
  %288 = vmatpush1.msra.mxu0 %v203
  %289 = vmatprep.subr.mxu0 0.0
  %290 = vmatpush1.msra.mxu0 %v204
  %291 = vmatprep.subr.mxu0 0.0
  %292 = vmatpush1.msra.mxu0 %v205
  %293 = vmatprep.subr.mxu0 0.0
  %294 = vmatpush1.msra.mxu0 %v206
  %295 = vmatprep.subr.mxu0 0.0
  %296 = vmatpush1.msra.mxu0 %v207
  %297 = vmatprep.subr.mxu0 0.0
  %298 = vmatpush1.msra.mxu0 %v208
  %299 = vmatprep.subr.mxu0 0.0
  %300 = vmatpush1.msra.mxu0 0.0
  %301 = vmatprep.subr.mxu0 0.0
  %302 = vmatpush1.msra.mxu0 0.0
  %303 = vmatprep.subr.mxu0 0.0
  %304 = vmatpush1.msra.mxu0 0.0
  %305 = vmatprep.subr.mxu0 0.0
  %306 = vmatpush1.msra.mxu0 0.0
  %307 = vmatprep.subr.mxu0 0.0
  %308 = vmatpush1.msra.mxu0 0.0
  %309 = vmatprep.subr.mxu0 0.0
  %310 = vmatpush1.msra.mxu0 0.0
  %311 = vmatprep.subr.mxu0 0.0
  %312 = vmatpush1.msra.mxu0 0.0
  %313 = vmatprep.subr.mxu0 0.0
  %314 = vmatpush1.msra.mxu0 0.0
  %315 = vmatprep.subr.mxu0 0.0
  %316 = vmatpush1.msra.mxu0 0.0
  %317 = vmatprep.subr.mxu0 0.0
  %318 = vmatpush1.msra.mxu0 0.0
  %319 = vmatprep.subr.mxu0 0.0
  %320 = vmatpush1.msra.mxu0 0.0
  %321 = vmatprep.subr.mxu0 0.0
  %322 = vmatpush1.msra.mxu0 0.0
  %323 = vmatprep.subr.mxu0 0.0
  %324 = vmatpush1.msra.mxu0 0.0
  %325 = vmatprep.subr.mxu0 0.0
  %326 = vmatpush1.msra.mxu0 0.0
  %327 = vmatprep.subr.mxu0 0.0
  %328 = vmatpush1.msra.mxu0 0.0
  %329 = vmatprep.subr.mxu0 0.0
  %330 = vmatpush1.msra.mxu0 0.0
  %331 = vmatprep.subr.mxu0 0.0
  %332 = vmatpush1.msra.mxu0 0.0
  %333 = vmatprep.subr.mxu0 0.0
  %334 = vmatpush1.msra.mxu0 0.0
  %335 = vmatprep.subr.mxu0 0.0
  %336 = vmatpush1.msra.mxu0 0.0
  %337 = vmatprep.subr.mxu0 0.0
  %338 = vmatpush1.msra.mxu0 0.0
  %339 = vmatprep.subr.mxu0 0.0
  %340 = vmatpush1.msra.mxu0 0.0
  %341 = vmatprep.subr.mxu0 0.0
  %342 = vmatpush1.msra.mxu0 0.0
  %343 = vmatprep.subr.mxu0 0.0
  %344 = vmatpush1.msra.mxu0 0.0
  %345 = vmatprep.subr.mxu0 0.0
  %346 = vmatpush1.msra.mxu0 0.0
  %347 = vmatprep.mubr.f32.mxu0 0.0
  %348 = vmatmul.mubr.f32.gmra.mrb[0].mxu0 %v45
  %v349 = vpop.f32.mrb[0].mxu0
  %v350 = vadd.f32 %v280, %v349
  %v351 = vpop.f32.mrb[0].mxu0
  %352 = vdwg.mxu0
  %vm353 = vcmask 517120
  %354 = vst.msk [vmem:[#allocation2] sm:$0x3] %vm353, %v350
  // Predicated region
  $region30: #{stacked_lssl_forward.1} parent=0 // pred_check
    _
  $region31: #{stacked_lssl_forward.1} parent=0 // pred_check_branch
    %356 = sbr.rel (0) target = $region33
  $region32: #{stacked_lssl_forward.1} parent=0 // pred_region
    _
  $region33: #{stacked_lssl_forward.1} parent=0 // pred_fallthru
    _
  // Predicated region
  $region34: #{stacked_lssl_forward.1} parent=0 // pred_check
    _
  $region35: #{stacked_lssl_forward.1} parent=0 // pred_check_branch
    %358 = sbr.rel (0) target = $region37
  $region36: #{stacked_lssl_forward.1} parent=0 // pred_region
    _
  $region37: #{stacked_lssl_forward.1} parent=0 // pred_fallthru
    _

</llo_original>
